<compile_context>
chip_gen: v6e
topology: v6e:2x2x1
jax: 0.10.0
libtpu: 0.0.40
codegen_flags: <defaults>
</compile_context>

<pallas_src>
import jax
import jax.numpy as jnp
from jax import lax
from jax.experimental import pallas as pl
from jax.experimental.pallas import tpu as pltpu

SELU_ALPHA = 1.6732632423543772
SELU_SCALE = 1.0507009873554805


def _selu_core(x):
    # SELU without the trailing SELU_SCALE multiply (folded into the next layer's
    # weights).  exp argument clamped so the unselected positive branch never overflows.
    return jnp.where(x > 0, x, SELU_ALPHA * jnp.exp(jnp.minimum(x, 0.0)) - SELU_ALPHA)


def mlp_kernel(x_ref, w1_ref, b1_ref, w2_ref, b2_ref, w3_ref, b3_ref, o_ref):
    # x_ref:  (block_b, D_in) f32   -- natural PyTorch layout, no wrapper transpose
    # w1_ref: (H1, D_in)      f32   (PyTorch (out, in) layout)
    # w2_ref: (H2, H1)        f32   (pre-scaled by SELU_SCALE)
    # w3_ref: (1, H2)         f32   (pre-scaled by SELU_SCALE)
    # b*_ref: (H1,1)/(H2,1)/(1,1) f32
    # o_ref:  (1, block_b)    f32   (lane-dense output row)

    # fc1: contract D_in of W1 with D_in of x -> (H1, block_b); batch lands on lanes.
    h1 = lax.dot_general(
        w1_ref[...], x_ref[...],
        dimension_numbers=(((1,), (1,)), ((), ())),
        preferred_element_type=jnp.float32,
    )
    # SELU (AlphaDropout is identity in eval mode); scale folded into W2.
    h1 = _selu_core(h1 + b1_ref[...])

    # fc2 (f32 matmul; MXU has plenty of slack, no bf16 cast pass).
    h2 = jnp.dot(w2_ref[...], h1, preferred_element_type=jnp.float32)   # (H2, block_b)
    h2 = _selu_core(h2 + b2_ref[...])

    # fc3 as a one-row MXU matmul; keeps the VALU/XLU (the binding units) free.
    out = jnp.dot(w3_ref[...], h2, preferred_element_type=jnp.float32) + b3_ref[...]
    o_ref[...] = out.astype(o_ref.dtype)                                # (1, block_b)


def mlp_forward(x, params, *, block_b=2048):
    """x: (B, D_in) f32.  params in PyTorch layout:
       W1 (256, D_in), b1 (256,), W2 (128, 256), b2 (128,), W3 (1, 128), b3 (1,)."""
    W1, b1, W2, b2, W3, b3 = params
    B, D_in = x.shape
    H1 = W1.shape[0]
    H2 = W2.shape[0]

    # Tile selection: whole batch in one step when it fits; otherwise a large
    # lane-aligned tile (multiple of 128).  The ragged last block is masked by
    # Pallas (no jnp.pad pass over x), and padded output columns are never written.
    if B <= block_b:
        eff_b = B                           # single step, full-dim blocks
    else:
        eff_b = max(128, (block_b // 128) * 128)
    grid = (pl.cdiv(B, eff_b),)

    # One-time trace-level weight prep (tiny arrays, no per-batch HBM pass):
    # fold SELU_SCALE into W2 / W3, reshape biases to broadcast over lanes.
    W1c = W1.astype(jnp.float32)                              # (H1, D_in)
    W2c = (SELU_SCALE * W2).astype(jnp.float32)               # (H2, H1)
    w3c = (SELU_SCALE * W3).reshape(1, H2).astype(jnp.float32)  # (1, H2) row
    b1c = b1.reshape(H1, 1).astype(jnp.float32)
    b2c = b2.reshape(H2, 1).astype(jnp.float32)
    b3c = b3.reshape(1, 1).astype(jnp.float32)

    out = pl.pallas_call(
        mlp_kernel,
        out_shape=jax.ShapeDtypeStruct((1, B), jnp.float32),
        grid_spec=pltpu.PrefetchScalarGridSpec(
            num_scalar_prefetch=0,
            grid=grid,
            in_specs=[
                pl.BlockSpec((eff_b, D_in), lambda i: (i, 0)),  # x tile (streams)
                pl.BlockSpec((H1, D_in), lambda i: (0, 0)),     # W1 (resident)
                pl.BlockSpec((H1, 1), lambda i: (0, 0)),        # b1
                pl.BlockSpec((H2, H1), lambda i: (0, 0)),       # W2 (resident)
                pl.BlockSpec((H2, 1), lambda i: (0, 0)),        # b2
                pl.BlockSpec((1, H2), lambda i: (0, 0)),        # w3 row
                pl.BlockSpec((1, 1), lambda i: (0, 0)),         # b3
            ],
            out_specs=pl.BlockSpec((1, eff_b), lambda i: (0, i)),  # lane-dense row
        ),
        compiler_params=pltpu.CompilerParams(
            # Batch tiles are independent -> megacore / 2-TC sharding on v7x.
            dimension_semantics=("parallel",),
        ),
    )(x.astype(jnp.float32), W1c, b1c, W2c, b2c, w3c, b3c)

    return out.T  # (B, 1)


def init_params(key, input_dim):
    """PyTorch nn.Linear default init: uniform(-1/sqrt(in), 1/sqrt(in)),
    weights stored PyTorch-style as (out_features, in_features)."""
    dims = [(input_dim, 256), (256, 128), (128, 1)]
    params = []
    keys = jax.random.split(key, 2 * len(dims))
    for idx, (din, dout) in enumerate(dims):
        bound = 1.0 / (din ** 0.5)
        w = jax.random.uniform(keys[2 * idx], (dout, din), jnp.float32, -bound, bound)
        b = jax.random.uniform(keys[2 * idx + 1], (dout,), jnp.float32, -bound, bound)
        params.extend([w, b])
    return tuple(params)


def reference_forward(x, params):
    """Pure-JAX f32 reference (AlphaDropout identity in eval mode)."""
    W1, b1, W2, b2, W3, b3 = params
    hp = lax.Precision.HIGHEST
    h1 = jax.nn.selu(jnp.dot(x, W1.T, precision=hp) + b1)
    h2 = jax.nn.selu(jnp.dot(h1, W2.T, precision=hp) + b2)
    return jnp.dot(h2, W3.T, precision=hp) + b3


if __name__ == "__main__":
    key = jax.random.PRNGKey(0)
    k_x, k_p = jax.random.split(key)

    batch, input_dim = 16, 32
    x = jax.random.normal(k_x, (batch, input_dim), dtype=jnp.float32)
    params = init_params(k_p, input_dim)

    # Small batch: single grid step, full-dim blocks.
    out = jax.block_until_ready(mlp_forward(x, params))
    ref = reference_forward(x, params)
    assert out.shape == (batch, 1), out.shape
    assert jnp.allclose(out, ref, atol=1e-2, rtol=1e-2), (out, ref)

    # Multi-step + ragged last block: exercises the no-pad masked tail path.
    x2 = jax.random.normal(k_x, (300, input_dim), dtype=jnp.float32)
    out2 = jax.block_until_ready(mlp_forward(x2, params, block_b=256))
    ref2 = reference_forward(x2, params)
    assert out2.shape == (300, 1), out2.shape
    assert jnp.allclose(out2, ref2, atol=1e-2, rtol=1e-2), (out2, ref2)

    print("KERNEL_OK")
</pallas_src>

<mosaic_0001>
module attributes {stable_mosaic.version = 11 : i64} {
  func.func @mlp_kernel(%arg0: i32, %arg1: memref<16x32xf32, #tpu.memory_space<vmem>>, %arg2: memref<256x32xf32, #tpu.memory_space<vmem>>, %arg3: memref<256x1xf32, #tpu.memory_space<vmem>>, %arg4: memref<128x256xf32, #tpu.memory_space<vmem>>, %arg5: memref<128x1xf32, #tpu.memory_space<vmem>>, %arg6: memref<1x128xf32, #tpu.memory_space<vmem>>, %arg7: memref<1x1xf32, #tpu.memory_space<vmem>>, %arg8: memref<1x16xf32, #tpu.memory_space<vmem>>) attributes {dimension_semantics = [#tpu.dimension_semantics<parallel>], iteration_bounds = array<i64: 1>, scalar_prefetch = 0 : i64, scratch_operands = 0 : i64, tpu.core_type = #tpu.core_type<tc>, window_params = [{transform_indices = @transform_0, window_bounds = array<i64: 16, 32>}, {pipeline_mode = #tpu.pipeline_mode<synchronous>, transform_indices = @transform_1, window_bounds = array<i64: 256, 32>}, {pipeline_mode = #tpu.pipeline_mode<synchronous>, transform_indices = @transform_2, window_bounds = array<i64: 256, 1>}, {pipeline_mode = #tpu.pipeline_mode<synchronous>, transform_indices = @transform_3, window_bounds = array<i64: 128, 256>}, {pipeline_mode = #tpu.pipeline_mode<synchronous>, transform_indices = @transform_4, window_bounds = array<i64: 128, 1>}, {pipeline_mode = #tpu.pipeline_mode<synchronous>, transform_indices = @transform_5, window_bounds = array<i64: 1, 128>}, {pipeline_mode = #tpu.pipeline_mode<synchronous>, transform_indices = @transform_6, window_bounds = array<i64: 1, 1>}, {transform_indices = @transform_7, window_bounds = array<i64: 1, 16>}]} {
    %c0 = arith.constant 0 : index
    %c0_0 = arith.constant 0 : index
    %0 = vector.load %arg2[%c0, %c0_0] : memref<256x32xf32, #tpu.memory_space<vmem>>, vector<256x32xf32>
    %c0_1 = arith.constant 0 : index
    %c0_2 = arith.constant 0 : index
    %1 = vector.load %arg1[%c0_1, %c0_2] : memref<16x32xf32, #tpu.memory_space<vmem>>, vector<16x32xf32>
    %cst = arith.constant dense<0.000000e+00> : vector<256x16xf32>
    %2 = tpu.matmul %0, %1, %cst {dimension_numbers = #tpu.dot_dimension_numbers<[1], [1], [0], [0], [0, 0, 1, 0], [], []>} : vector<256x32xf32>, vector<16x32xf32>, vector<256x16xf32> -> vector<256x16xf32>
    %c0_3 = arith.constant 0 : index
    %c0_4 = arith.constant 0 : index
    %3 = vector.load %arg3[%c0_3, %c0_4] : memref<256x1xf32, #tpu.memory_space<vmem>>, vector<256x1xf32>
    %4 = vector.broadcast %3 : vector<256x1xf32> to vector<256x16xf32>
    %5 = arith.addf %2, %4 : vector<256x16xf32>
    %cst_5 = arith.constant 0.000000e+00 : f32
    %6 = vector.broadcast %cst_5 : f32 to vector<256x16xf32>
    %7 = arith.cmpf ogt, %5, %6 : vector<256x16xf32>
    %cst_6 = arith.constant 0.000000e+00 : f32
    %8 = vector.broadcast %cst_6 : f32 to vector<256x16xf32>
    %9 = arith.minimumf %5, %8 : vector<256x16xf32>
    %10 = math.exp %9 : vector<256x16xf32>
    %cst_7 = arith.constant 1.67326319 : f32
    %11 = vector.broadcast %cst_7 : f32 to vector<256x16xf32>
    %12 = arith.mulf %11, %10 : vector<256x16xf32>
    %cst_8 = arith.constant 1.67326319 : f32
    %13 = vector.broadcast %cst_8 : f32 to vector<256x16xf32>
    %14 = arith.subf %12, %13 : vector<256x16xf32>
    %15 = arith.select %7, %5, %14 : vector<256x16xi1>, vector<256x16xf32>
    %c0_9 = arith.constant 0 : index
    %c0_10 = arith.constant 0 : index
    %16 = vector.load %arg4[%c0_9, %c0_10] : memref<128x256xf32, #tpu.memory_space<vmem>>, vector<128x256xf32>
    %cst_11 = arith.constant dense<0.000000e+00> : vector<128x16xf32>
    %17 = tpu.matmul %16, %15, %cst_11 {dimension_numbers = #tpu.dot_dimension_numbers<[1], [0], [0], [1], [0, 0, 1, 1], [], []>} : vector<128x256xf32>, vector<256x16xf32>, vector<128x16xf32> -> vector<128x16xf32>
    %c0_12 = arith.constant 0 : index
    %c0_13 = arith.constant 0 : index
    %18 = vector.load %arg5[%c0_12, %c0_13] : memref<128x1xf32, #tpu.memory_space<vmem>>, vector<128x1xf32>
    %19 = vector.broadcast %18 : vector<128x1xf32> to vector<128x16xf32>
    %20 = arith.addf %17, %19 : vector<128x16xf32>
    %cst_14 = arith.constant 0.000000e+00 : f32
    %21 = vector.broadcast %cst_14 : f32 to vector<128x16xf32>
    %22 = arith.cmpf ogt, %20, %21 : vector<128x16xf32>
    %cst_15 = arith.constant 0.000000e+00 : f32
    %23 = vector.broadcast %cst_15 : f32 to vector<128x16xf32>
    %24 = arith.minimumf %20, %23 : vector<128x16xf32>
    %25 = math.exp %24 : vector<128x16xf32>
    %cst_16 = arith.constant 1.67326319 : f32
    %26 = vector.broadcast %cst_16 : f32 to vector<128x16xf32>
    %27 = arith.mulf %26, %25 : vector<128x16xf32>
    %cst_17 = arith.constant 1.67326319 : f32
    %28 = vector.broadcast %cst_17 : f32 to vector<128x16xf32>
    %29 = arith.subf %27, %28 : vector<128x16xf32>
    %30 = arith.select %22, %20, %29 : vector<128x16xi1>, vector<128x16xf32>
    %c0_18 = arith.constant 0 : index
    %c0_19 = arith.constant 0 : index
    %31 = vector.load %arg6[%c0_18, %c0_19] : memref<1x128xf32, #tpu.memory_space<vmem>>, vector<1x128xf32>
    %cst_20 = arith.constant dense<0.000000e+00> : vector<1x16xf32>
    %32 = tpu.matmul %31, %30, %cst_20 {dimension_numbers = #tpu.dot_dimension_numbers<[1], [0], [0], [1], [0, 0, 1, 1], [], []>} : vector<1x128xf32>, vector<128x16xf32>, vector<1x16xf32> -> vector<1x16xf32>
    %c0_21 = arith.constant 0 : index
    %c0_22 = arith.constant 0 : index
    %33 = vector.load %arg7[%c0_21, %c0_22] : memref<1x1xf32, #tpu.memory_space<vmem>>, vector<1x1xf32>
    %34 = vector.broadcast %33 : vector<1x1xf32> to vector<1x16xf32>
    %35 = arith.addf %32, %34 : vector<1x16xf32>
    %c0_23 = arith.constant 0 : index
    %c0_24 = arith.constant 0 : index
    %36 = vector.load %arg8[%c0_23, %c0_24] : memref<1x16xf32, #tpu.memory_space<vmem>>, vector<1x16xf32>
    tpu.vector_store %arg8[%c0_23, %c0_24], %35 {strides = array<i32>} : memref<1x16xf32, #tpu.memory_space<vmem>>, vector<1x16xf32>,
    return
  }
  func.func @transform_0(%arg0: i32) -> (i32, i32) {
    %c0_i32 = arith.constant 0 : i32
    %c0_i32_0 = arith.constant 0 : i32
    return %arg0, %c0_i32 : i32, i32
  }
  func.func @transform_1(%arg0: i32) -> (i32, i32) {
    %c0_i32 = arith.constant 0 : i32
    %c0_i32_0 = arith.constant 0 : i32
    %c0_i32_1 = arith.constant 0 : i32
    return %c0_i32, %c0_i32_0 : i32, i32
  }
  func.func @transform_2(%arg0: i32) -> (i32, i32) {
    %c0_i32 = arith.constant 0 : i32
    %c0_i32_0 = arith.constant 0 : i32
    %c0_i32_1 = arith.constant 0 : i32
    return %c0_i32, %c0_i32_0 : i32, i32
  }
  func.func @transform_3(%arg0: i32) -> (i32, i32) {
    %c0_i32 = arith.constant 0 : i32
    %c0_i32_0 = arith.constant 0 : i32
    %c0_i32_1 = arith.constant 0 : i32
    return %c0_i32, %c0_i32_0 : i32, i32
  }
  func.func @transform_4(%arg0: i32) -> (i32, i32) {
    %c0_i32 = arith.constant 0 : i32
    %c0_i32_0 = arith.constant 0 : i32
    %c0_i32_1 = arith.constant 0 : i32
    return %c0_i32, %c0_i32_0 : i32, i32
  }
  func.func @transform_5(%arg0: i32) -> (i32, i32) {
    %c0_i32 = arith.constant 0 : i32
    %c0_i32_0 = arith.constant 0 : i32
    %c0_i32_1 = arith.constant 0 : i32
    return %c0_i32, %c0_i32_0 : i32, i32
  }
  func.func @transform_6(%arg0: i32) -> (i32, i32) {
    %c0_i32 = arith.constant 0 : i32
    %c0_i32_0 = arith.constant 0 : i32
    %c0_i32_1 = arith.constant 0 : i32
    return %c0_i32, %c0_i32_0 : i32, i32
  }
  func.func @transform_7(%arg0: i32) -> (i32, i32) {
    %c0_i32 = arith.constant 0 : i32
    %c0_i32_0 = arith.constant 0 : i32
    return %c0_i32, %arg0 : i32, i32
  }
}

</mosaic_0001>

<llo_original>
// kernel: tpu_custom_call.1
$region0: #{tpu_custom_call.1}
  #allocation0 [shape = 'u32[]', space=smem, size = 0x4, offset = 0x4, fixed_abs, tag = 'smem constant byte address 0x4 - core index']
  #allocation1 [shape = 'u32[144,128]{1,0:T(1,128)}', space=vmem, size = 0x12000, scoped, tag = 'internal scratch']
  #allocation2 [shape = 'f32[1,1]{1,0:T(1,128)S(1)}', space=vmem, size = 0x200, scoped, tag = 'scoped memory for tpu_custom_call.1']
  %s0 = inlined_call_operand.vmem [shape: f32[16,32], index: 0, kind: input, shape index: {}]
  %s1 = inlined_call_operand.vmem [shape: f32[256,32], index: 1, kind: input, shape index: {}]
  %s2 = inlined_call_operand.vmem [shape: f32[256,1], index: 2, kind: input, shape index: {}]
  %s3 = inlined_call_operand.vmem [shape: f32[128,256], index: 3, kind: input, shape index: {}]
  %s4 = inlined_call_operand.vmem [shape: f32[128,1], index: 4, kind: input, shape index: {}]
  %s5 = inlined_call_operand.vmem [shape: f32[1,128], index: 5, kind: input, shape index: {}]
  %s6 = inlined_call_operand.<no memory space> [shape: f32[1,1], index: 6, kind: input, shape index: {}]
  %s7 = inlined_call_operand.hbm [shape: f32[1,16], index: 7, kind: output, shape index: {}]
  %s8 = sld [smem:[#allocation0]]
  $region38: #{tpu_custom_call.1} parent=0
    _
  %s10 = ssub.s32 1, %s8
  %s11 = scalar_select 0, %s10, %s8
  %v12 = vstv %s6
  %13 = vst [vmem:[#allocation2] sm:$0x1] %v12
  $region1: #{tpu_custom_call.1} parent=0
    #allocation3 [shape = 'u8[512]{0}', space=vmem, size = 0x400, scoped, tag = 'output window, operand 0, single buffered']
    #allocation4 [shape = 's32[1]{0}', space=sflag, size = 0x4, scoped, tag = 'scoped memory for tpu_custom_call.1']
    %14 = vsyncpa [#allocation4], 0
    // Predicated region
    $region2: #{tpu_custom_call.1} parent=1 // pred_check
      _
    $region3: #{tpu_custom_call.1} parent=1 // pred_check_branch
      %16 = sbr.rel (0) target = $region5
    $region4: #{tpu_custom_call.1} parent=1 // pred_region
      _
    $region5: #{tpu_custom_call.1} parent=1 // pred_fallthru
      _
    // Predicated region
    $region6: #{tpu_custom_call.1} parent=1 // pred_check
      _
    $region7: #{tpu_custom_call.1} parent=1 // pred_check_branch
      %18 = sbr.rel (0) target = $region9
    $region8: #{tpu_custom_call.1} parent=1 // pred_region
      _
    $region9: #{tpu_custom_call.1} parent=1 // pred_fallthru
      _
    // Predicated region
    $region10: #{tpu_custom_call.1} parent=1 // pred_check
      _
    $region11: #{tpu_custom_call.1} parent=1 // pred_check_branch
      %20 = sbr.rel (0) target = $region13
    $region12: #{tpu_custom_call.1} parent=1 // pred_region
      _
    $region13: #{tpu_custom_call.1} parent=1 // pred_fallthru
      _
    // Predicated region
    $region14: #{tpu_custom_call.1} parent=1 // pred_check
      _
    $region15: #{tpu_custom_call.1} parent=1 // pred_check_branch
      %22 = sbr.rel (0) target = $region17
    $region16: #{tpu_custom_call.1} parent=1 // pred_region
      _
    $region17: #{tpu_custom_call.1} parent=1 // pred_fallthru
      _
    // Predicated region
    $region18: #{tpu_custom_call.1} parent=1 // pred_check
      _
    $region19: #{tpu_custom_call.1} parent=1 // pred_check_branch
      %24 = sbr.rel (0) target = $region21
    $region20: #{tpu_custom_call.1} parent=1 // pred_region
      _
    $region21: #{tpu_custom_call.1} parent=1 // pred_fallthru
      _
    // Predicated region
    $region22: #{tpu_custom_call.1} parent=1 // pred_check
      _
    $region23: #{tpu_custom_call.1} parent=1 // pred_check_branch
      %26 = sbr.rel (0) target = $region25
    $region24: #{tpu_custom_call.1} parent=1 // pred_region
      _
    $region25: #{tpu_custom_call.1} parent=1 // pred_fallthru
      _
    // Predicated region
    $region26: #{tpu_custom_call.1} parent=1 // pred_check
      _
    $region27: #{tpu_custom_call.1} parent=1 // pred_check_branch
      %28 = sbr.rel (0) target = $region29
    $region28: #{tpu_custom_call.1} parent=1 // pred_region
      _
    $region29: #{tpu_custom_call.1} parent=1 // pred_fallthru
      _
    %v29 = vld [vmem:[%s1] sm:$0xff]
    %v30 = vld [vmem:[%s1 + $0x8] sm:$0xff]
    %v31 = vld [vmem:[%s1 + $0x10] sm:$0xff]
    %v32 = vld [vmem:[%s1 + $0x18] sm:$0xff]
    %v33 = vld [vmem:[%s1 + $0x20] sm:$0xff]
    %v34 = vld [vmem:[%s1 + $0x28] sm:$0xff]
    %v35 = vld [vmem:[%s1 + $0x30] sm:$0xff]
    %v36 = vld [vmem:[%s1 + $0x38] sm:$0xff]
    %v37 = vld [vmem:[%s1 + $0x40] sm:$0xff]
    %v38 = vld [vmem:[%s1 + $0x48] sm:$0xff]
    %v39 = vld [vmem:[%s1 + $0x50] sm:$0xff]
    %v40 = vld [vmem:[%s1 + $0x58] sm:$0xff]
    %v41 = vld [vmem:[%s1 + $0x60] sm:$0xff]
    %v42 = vld [vmem:[%s1 + $0x68] sm:$0xff]
    %v43 = vld [vmem:[%s1 + $0x70] sm:$0xff]
    %v44 = vld [vmem:[%s1 + $0x78] sm:$0xff]
    %v45 = vld [vmem:[%s1 + $0x80] sm:$0xff]
    %v46 = vld [vmem:[%s1 + $0x88] sm:$0xff]
    %v47 = vld [vmem:[%s1 + $0x90] sm:$0xff]
    %v48 = vld [vmem:[%s1 + $0x98] sm:$0xff]
    %v49 = vld [vmem:[%s1 + $0xa0] sm:$0xff]
    %v50 = vld [vmem:[%s1 + $0xa8] sm:$0xff]
    %v51 = vld [vmem:[%s1 + $0xb0] sm:$0xff]
    %v52 = vld [vmem:[%s1 + $0xb8] sm:$0xff]
    %v53 = vld [vmem:[%s1 + $0xc0] sm:$0xff]
    %v54 = vld [vmem:[%s1 + $0xc8] sm:$0xff]
    %v55 = vld [vmem:[%s1 + $0xd0] sm:$0xff]
    %v56 = vld [vmem:[%s1 + $0xd8] sm:$0xff]
    %v57 = vld [vmem:[%s1 + $0xe0] sm:$0xff]
    %v58 = vld [vmem:[%s1 + $0xe8] sm:$0xff]
    %v59 = vld [vmem:[%s1 + $0xf0] sm:$0xff]
    %v60 = vld [vmem:[%s1 + $0xf8] sm:$0xff]
    %v61 = vld [vmem:[%s0] sm:$0xff]
    %v62 = vld [vmem:[%s0 + $0x8] sm:$0xff]
    %v63 = vld [vmem:[%s2] sm:$0xff]
    %v64 = vld [vmem:[%s2 + $0x8] sm:$0xff]
    %v65 = vld [vmem:[%s2 + $0x10] sm:$0xff]
    %v66 = vld [vmem:[%s2 + $0x18] sm:$0xff]
    %v67 = vld [vmem:[%s2 + $0x20] sm:$0xff]
    %v68 = vld [vmem:[%s2 + $0x28] sm:$0xff]
    %v69 = vld [vmem:[%s2 + $0x30] sm:$0xff]
    %v70 = vld [vmem:[%s2 + $0x38] sm:$0xff]
    %v71 = vld [vmem:[%s2 + $0x40] sm:$0xff]
    %v72 = vld [vmem:[%s2 + $0x48] sm:$0xff]
    %v73 = vld [vmem:[%s2 + $0x50] sm:$0xff]
    %v74 = vld [vmem:[%s2 + $0x58] sm:$0xff]
    %v75 = vld [vmem:[%s2 + $0x60] sm:$0xff]
    %v76 = vld [vmem:[%s2 + $0x68] sm:$0xff]
    %v77 = vld [vmem:[%s2 + $0x70] sm:$0xff]
    %v78 = vld [vmem:[%s2 + $0x78] sm:$0xff]
    %v79 = vld [vmem:[%s2 + $0x80] sm:$0xff]
    %v80 = vld [vmem:[%s2 + $0x88] sm:$0xff]
    %v81 = vld [vmem:[%s2 + $0x90] sm:$0xff]
    %v82 = vld [vmem:[%s2 + $0x98] sm:$0xff]
    %v83 = vld [vmem:[%s2 + $0xa0] sm:$0xff]
    %v84 = vld [vmem:[%s2 + $0xa8] sm:$0xff]
    %v85 = vld [vmem:[%s2 + $0xb0] sm:$0xff]
    %v86 = vld [vmem:[%s2 + $0xb8] sm:$0xff]
    %v87 = vld [vmem:[%s2 + $0xc0] sm:$0xff]
    %v88 = vld [vmem:[%s2 + $0xc8] sm:$0xff]
    %v89 = vld [vmem:[%s2 + $0xd0] sm:$0xff]
    %v90 = vld [vmem:[%s2 + $0xd8] sm:$0xff]
    %v91 = vld [vmem:[%s2 + $0xe0] sm:$0xff]
    %v92 = vld [vmem:[%s2 + $0xe8] sm:$0xff]
    %v93 = vld [vmem:[%s2 + $0xf0] sm:$0xff]
    %v94 = vld [vmem:[%s2 + $0xf8] sm:$0xff]
    %96 = vset.pattern.permute.xlu0 0
    %97 = vperm.xlu0 %96, %v63
    %v98 = vpop.permute.xlu0 %97
    %101 = vset.pattern.permute.xlu0 0
    %102 = vperm.xlu0 %101, %v64
    %v103 = vpop.permute.xlu0 %102
    %106 = vset.pattern.permute.xlu0 0
    %107 = vperm.xlu0 %106, %v65
    %v108 = vpop.permute.xlu0 %107
    %111 = vset.pattern.permute.xlu0 0
    %112 = vperm.xlu0 %111, %v66
    %v113 = vpop.permute.xlu0 %112
    %116 = vset.pattern.permute.xlu0 0
    %117 = vperm.xlu0 %116, %v67
    %v118 = vpop.permute.xlu0 %117
    %121 = vset.pattern.permute.xlu0 0
    %122 = vperm.xlu0 %121, %v68
    %v123 = vpop.permute.xlu0 %122
    %126 = vset.pattern.permute.xlu0 0
    %127 = vperm.xlu0 %126, %v69
    %v128 = vpop.permute.xlu0 %127
    %131 = vset.pattern.permute.xlu0 0
    %132 = vperm.xlu0 %131, %v70
    %v133 = vpop.permute.xlu0 %132
    %136 = vset.pattern.permute.xlu0 0
    %137 = vperm.xlu0 %136, %v71
    %v138 = vpop.permute.xlu0 %137
    %141 = vset.pattern.permute.xlu0 0
    %142 = vperm.xlu0 %141, %v72
    %v143 = vpop.permute.xlu0 %142
    %146 = vset.pattern.permute.xlu0 0
    %147 = vperm.xlu0 %146, %v73
    %v148 = vpop.permute.xlu0 %147
    %151 = vset.pattern.permute.xlu0 0
    %152 = vperm.xlu0 %151, %v74
    %v153 = vpop.permute.xlu0 %152
    %156 = vset.pattern.permute.xlu0 0
    %157 = vperm.xlu0 %156, %v75
    %v158 = vpop.permute.xlu0 %157
    %161 = vset.pattern.permute.xlu0 0
    %162 = vperm.xlu0 %161, %v76
    %v163 = vpop.permute.xlu0 %162
    %166 = vset.pattern.permute.xlu0 0
    %167 = vperm.xlu0 %166, %v77
    %v168 = vpop.permute.xlu0 %167
    %171 = vset.pattern.permute.xlu0 0
    %172 = vperm.xlu0 %171, %v78
    %v173 = vpop.permute.xlu0 %172
    %176 = vset.pattern.permute.xlu0 0
    %177 = vperm.xlu0 %176, %v79
    %v178 = vpop.permute.xlu0 %177
    %181 = vset.pattern.permute.xlu0 0
    %182 = vperm.xlu0 %181, %v80
    %v183 = vpop.permute.xlu0 %182
    %186 = vset.pattern.permute.xlu0 0
    %187 = vperm.xlu0 %186, %v81
    %v188 = vpop.permute.xlu0 %187
    %191 = vset.pattern.permute.xlu0 0
    %192 = vperm.xlu0 %191, %v82
    %v193 = vpop.permute.xlu0 %192
    %196 = vset.pattern.permute.xlu0 0
    %197 = vperm.xlu0 %196, %v83
    %v198 = vpop.permute.xlu0 %197
    %201 = vset.pattern.permute.xlu0 0
    %202 = vperm.xlu0 %201, %v84
    %v203 = vpop.permute.xlu0 %202
    %206 = vset.pattern.permute.xlu0 0
    %207 = vperm.xlu0 %206, %v85
    %v208 = vpop.permute.xlu0 %207
    %211 = vset.pattern.permute.xlu0 0
    %212 = vperm.xlu0 %211, %v86
    %v213 = vpop.permute.xlu0 %212
    %216 = vset.pattern.permute.xlu0 0
    %217 = vperm.xlu0 %216, %v87
    %v218 = vpop.permute.xlu0 %217
    %221 = vset.pattern.permute.xlu0 0
    %222 = vperm.xlu0 %221, %v88
    %v223 = vpop.permute.xlu0 %222
    %226 = vset.pattern.permute.xlu0 0
    %227 = vperm.xlu0 %226, %v89
    %v228 = vpop.permute.xlu0 %227
    %231 = vset.pattern.permute.xlu0 0
    %232 = vperm.xlu0 %231, %v90
    %v233 = vpop.permute.xlu0 %232
    %236 = vset.pattern.permute.xlu0 0
    %237 = vperm.xlu0 %236, %v91
    %v238 = vpop.permute.xlu0 %237
    %241 = vset.pattern.permute.xlu0 0
    %242 = vperm.xlu0 %241, %v92
    %v243 = vpop.permute.xlu0 %242
    %246 = vset.pattern.permute.xlu0 0
    %247 = vperm.xlu0 %246, %v93
    %v248 = vpop.permute.xlu0 %247
    %251 = vset.pattern.permute.xlu0 0
    %252 = vperm.xlu0 %251, %v94
    %v253 = vpop.permute.xlu0 %252
    %vm255 = vcmask 261120
    %v257 = vsel %vm255, %v29, 0
    %v260 = vsel %vm255, %v30, 0
    %v263 = vsel %vm255, %v31, 0
    %v266 = vsel %vm255, %v32, 0
    %v269 = vsel %vm255, %v33, 0
    %v272 = vsel %vm255, %v34, 0
    %v275 = vsel %vm255, %v35, 0
    %v278 = vsel %vm255, %v36, 0
    %v281 = vsel %vm255, %v37, 0
    %v284 = vsel %vm255, %v38, 0
    %v287 = vsel %vm255, %v39, 0
    %v290 = vsel %vm255, %v40, 0
    %v293 = vsel %vm255, %v41, 0
    %v296 = vsel %vm255, %v42, 0
    %v299 = vsel %vm255, %v43, 0
    %v302 = vsel %vm255, %v44, 0
    %v305 = vsel %vm255, %v45, 0
    %v308 = vsel %vm255, %v46, 0
    %v311 = vsel %vm255, %v47, 0
    %v314 = vsel %vm255, %v48, 0
    %v317 = vsel %vm255, %v49, 0
    %v320 = vsel %vm255, %v50, 0
    %v323 = vsel %vm255, %v51, 0
    %v326 = vsel %vm255, %v52, 0
    %v329 = vsel %vm255, %v53, 0
    %v332 = vsel %vm255, %v54, 0
    %v335 = vsel %vm255, %v55, 0
    %v338 = vsel %vm255, %v56, 0
    %v341 = vsel %vm255, %v57, 0
    %v344 = vsel %vm255, %v58, 0
    %v347 = vsel %vm255, %v59, 0
    %v350 = vsel %vm255, %v60, 0
    %v353 = vsel %vm255, %v61, 0
    %v356 = vsel %vm255, %v62, 0
    %358 = vmatprep.subr.mxu0 0.0
    %359 = vmatpush1.xpose.msra.mxu0 0.0
    %360 = vmatprep.subr.mxu0 0.0
    %361 = vmatpush1.xpose.msra.mxu0 0.0
    %362 = vmatprep.subr.mxu0 0.0
    %363 = vmatpush1.xpose.msra.mxu0 0.0
    %364 = vmatprep.subr.mxu0 0.0
    %365 = vmatpush1.xpose.msra.mxu0 0.0
    %366 = vmatprep.subr.mxu0 0.0
    %367 = vmatpush1.xpose.msra.mxu0 0.0
    %368 = vmatprep.subr.mxu0 0.0
    %369 = vmatpush1.xpose.msra.mxu0 0.0
    %370 = vmatprep.subr.mxu0 0.0
    %371 = vmatpush1.xpose.msra.mxu0 0.0
    %372 = vmatprep.subr.mxu0 0.0
    %373 = vmatpush1.xpose.msra.mxu0 0.0
    %374 = vmatprep.subr.mxu0 0.0
    %375 = vmatpush1.xpose.msra.mxu0 0.0
    %376 = vmatprep.subr.mxu0 0.0
    %377 = vmatpush1.xpose.msra.mxu0 0.0
    %378 = vmatprep.subr.mxu0 0.0
    %379 = vmatpush1.xpose.msra.mxu0 0.0
    %380 = vmatprep.subr.mxu0 0.0
    %381 = vmatpush1.xpose.msra.mxu0 0.0
    %382 = vmatprep.subr.mxu0 0.0
    %383 = vmatpush1.xpose.msra.mxu0 0.0
    %384 = vmatprep.subr.mxu0 0.0
    %385 = vmatpush1.xpose.msra.mxu0 0.0
    %386 = vmatprep.subr.mxu0 0.0
    %387 = vmatpush1.xpose.msra.mxu0 %v356
    %388 = vmatprep.subr.mxu0 0.0
    %389 = vmatpush1.xpose.msra.mxu0 %v353
    %390 = vmatprep.subr.mxu0 0.0
    %391 = vmatpush2.xpose.msra.mxu0 0.0
    %392 = vmatprep.subr.mxu0 0.0
    %393 = vmatpush2.xpose.msra.mxu0 0.0
    %394 = vmatprep.subr.mxu0 0.0
    %395 = vmatpush2.xpose.msra.mxu0 0.0
    %396 = vmatprep.subr.mxu0 0.0
    %397 = vmatpush2.xpose.msra.mxu0 0.0
    %398 = vmatprep.subr.mxu0 0.0
    %399 = vmatpush2.xpose.msra.mxu0 0.0
    %400 = vmatprep.subr.mxu0 0.0
    %401 = vmatpush2.xpose.msra.mxu0 0.0
    %402 = vmatprep.subr.mxu0 0.0
    %403 = vmatpush2.xpose.msra.mxu0 0.0
    %404 = vmatprep.subr.mxu0 0.0
    %405 = vmatpush2.xpose.msra.mxu0 0.0
    %406 = vmatprep.subr.mxu0 0.0
    %407 = vmatpush2.xpose.msra.mxu0 0.0
    %408 = vmatprep.subr.mxu0 0.0
    %409 = vmatpush2.xpose.msra.mxu0 0.0
    %410 = vmatprep.subr.mxu0 0.0
    %411 = vmatpush2.xpose.msra.mxu0 0.0
    %412 = vmatprep.subr.mxu0 0.0
    %413 = vmatpush2.xpose.msra.mxu0 0.0
    %414 = vmatprep.subr.mxu0 0.0
    %415 = vmatpush2.xpose.msra.mxu0 0.0
    %416 = vmatprep.subr.mxu0 0.0
    %417 = vmatpush2.xpose.msra.mxu0 0.0
    %418 = vmatprep.subr.mxu0 0.0
    %419 = vmatpush2.xpose.msra.mxu0 0.0
    %420 = vmatprep.subr.mxu0 0.0
    %421 = vmatpush2.xpose.msra.mxu0 0.0
    %422 = vmatprep.mubr.f32.mxu0 0.0
    %423 = vmatmul.mubr.f32.gmra.mxu0 %v257
    %v424 = vpop.f32.mrf.mxu0
    %v425 = vadd.f32 %v98, %v424
    %v426 = vpop.f32.mrf.mxu0
    %427 = vmatprep.mubr.f32.mxu0 0.0
    %428 = vmatmul.mubr.f32.gmra.mxu0 %v260
    %v429 = vpop.f32.mrf.mxu0
    %v430 = vadd.f32 %v103, %v429
    %v431 = vpop.f32.mrf.mxu0
    %432 = vmatprep.mubr.f32.mxu0 0.0
    %433 = vmatmul.mubr.f32.gmra.mxu0 %v263
    %v434 = vpop.f32.mrf.mxu0
    %v435 = vadd.f32 %v108, %v434
    %v436 = vpop.f32.mrf.mxu0
    %437 = vmatprep.mubr.f32.mxu0 0.0
    %438 = vmatmul.mubr.f32.gmra.mxu0 %v266
    %v439 = vpop.f32.mrf.mxu0
    %v440 = vadd.f32 %v113, %v439
    %v441 = vpop.f32.mrf.mxu0
    %442 = vmatprep.mubr.f32.mxu0 0.0
    %443 = vmatmul.mubr.f32.gmra.mxu0 %v269
    %v444 = vpop.f32.mrf.mxu0
    %v445 = vadd.f32 %v118, %v444
    %v446 = vpop.f32.mrf.mxu0
    %447 = vmatprep.mubr.f32.mxu0 0.0
    %448 = vmatmul.mubr.f32.gmra.mxu0 %v272
    %v449 = vpop.f32.mrf.mxu0
    %v450 = vadd.f32 %v123, %v449
    %v451 = vpop.f32.mrf.mxu0
    %452 = vmatprep.mubr.f32.mxu0 0.0
    %453 = vmatmul.mubr.f32.gmra.mxu0 %v275
    %v454 = vpop.f32.mrf.mxu0
    %v455 = vadd.f32 %v128, %v454
    %v456 = vpop.f32.mrf.mxu0
    %457 = vmatprep.mubr.f32.mxu0 0.0
    %458 = vmatmul.mubr.f32.gmra.mxu0 %v278
    %v459 = vpop.f32.mrf.mxu0
    %v460 = vadd.f32 %v133, %v459
    %v461 = vpop.f32.mrf.mxu0
    %462 = vmatprep.mubr.f32.mxu0 0.0
    %463 = vmatmul.mubr.f32.gmra.mxu0 %v281
    %v464 = vpop.f32.mrf.mxu0
    %v465 = vadd.f32 %v138, %v464
    %v466 = vpop.f32.mrf.mxu0
    %467 = vmatprep.mubr.f32.mxu0 0.0
    %468 = vmatmul.mubr.f32.gmra.mxu0 %v284
    %v469 = vpop.f32.mrf.mxu0
    %v470 = vadd.f32 %v143, %v469
    %v471 = vpop.f32.mrf.mxu0
    %472 = vmatprep.mubr.f32.mxu0 0.0
    %473 = vmatmul.mubr.f32.gmra.mxu0 %v287
    %v474 = vpop.f32.mrf.mxu0
    %v475 = vadd.f32 %v148, %v474
    %v476 = vpop.f32.mrf.mxu0
    %477 = vmatprep.mubr.f32.mxu0 0.0
    %478 = vmatmul.mubr.f32.gmra.mxu0 %v290
    %v479 = vpop.f32.mrf.mxu0
    %v480 = vadd.f32 %v153, %v479
    %v481 = vpop.f32.mrf.mxu0
    %482 = vmatprep.mubr.f32.mxu0 0.0
    %483 = vmatmul.mubr.f32.gmra.mxu0 %v293
    %v484 = vpop.f32.mrf.mxu0
    %v485 = vadd.f32 %v158, %v484
    %v486 = vpop.f32.mrf.mxu0
    %487 = vmatprep.mubr.f32.mxu0 0.0
    %488 = vmatmul.mubr.f32.gmra.mxu0 %v296
    %v489 = vpop.f32.mrf.mxu0
    %v490 = vadd.f32 %v163, %v489
    %v491 = vpop.f32.mrf.mxu0
    %492 = vmatprep.mubr.f32.mxu0 0.0
    %493 = vmatmul.mubr.f32.gmra.mxu0 %v299
    %v494 = vpop.f32.mrf.mxu0
    %v495 = vadd.f32 %v168, %v494
    %v496 = vpop.f32.mrf.mxu0
    %497 = vmatprep.mubr.f32.mxu0 0.0
    %498 = vmatmul.mubr.f32.gmra.mxu0 %v302
    %v499 = vpop.f32.mrf.mxu0
    %v500 = vadd.f32 %v173, %v499
    %v501 = vpop.f32.mrf.mxu0
    %502 = vmatprep.mubr.f32.mxu0 0.0
    %503 = vmatmul.mubr.f32.gmra.mxu0 %v305
    %v504 = vpop.f32.mrf.mxu0
    %v505 = vadd.f32 %v178, %v504
    %v506 = vpop.f32.mrf.mxu0
    %507 = vmatprep.mubr.f32.mxu0 0.0
    %508 = vmatmul.mubr.f32.gmra.mxu0 %v308
    %v509 = vpop.f32.mrf.mxu0
    %v510 = vadd.f32 %v183, %v509
    %v511 = vpop.f32.mrf.mxu0
    %512 = vmatprep.mubr.f32.mxu0 0.0
    %513 = vmatmul.mubr.f32.gmra.mxu0 %v311
    %v514 = vpop.f32.mrf.mxu0
    %v515 = vadd.f32 %v188, %v514
    %v516 = vpop.f32.mrf.mxu0
    %517 = vmatprep.mubr.f32.mxu0 0.0
    %518 = vmatmul.mubr.f32.gmra.mxu0 %v314
    %v519 = vpop.f32.mrf.mxu0
    %v520 = vadd.f32 %v193, %v519
    %v521 = vpop.f32.mrf.mxu0
    %522 = vmatprep.mubr.f32.mxu0 0.0
    %523 = vmatmul.mubr.f32.gmra.mxu0 %v317
    %v524 = vpop.f32.mrf.mxu0
    %v525 = vadd.f32 %v198, %v524
    %v526 = vpop.f32.mrf.mxu0
    %527 = vmatprep.mubr.f32.mxu0 0.0
    %528 = vmatmul.mubr.f32.gmra.mxu0 %v320
    %v529 = vpop.f32.mrf.mxu0
    %v530 = vadd.f32 %v203, %v529
    %v531 = vpop.f32.mrf.mxu0
    %532 = vmatprep.mubr.f32.mxu0 0.0
    %533 = vmatmul.mubr.f32.gmra.mxu0 %v323
    %v534 = vpop.f32.mrf.mxu0
    %v535 = vadd.f32 %v208, %v534
    %v536 = vpop.f32.mrf.mxu0
    %537 = vmatprep.mubr.f32.mxu0 0.0
    %538 = vmatmul.mubr.f32.gmra.mxu0 %v326
    %v539 = vpop.f32.mrf.mxu0
    %v540 = vadd.f32 %v213, %v539
    %v541 = vpop.f32.mrf.mxu0
    %542 = vmatprep.mubr.f32.mxu0 0.0
    %543 = vmatmul.mubr.f32.gmra.mxu0 %v329
    %v544 = vpop.f32.mrf.mxu0
    %v545 = vadd.f32 %v218, %v544
    %v546 = vpop.f32.mrf.mxu0
    %547 = vmatprep.mubr.f32.mxu0 0.0
    %548 = vmatmul.mubr.f32.gmra.mxu0 %v332
    %v549 = vpop.f32.mrf.mxu0
    %v550 = vadd.f32 %v223, %v549
    %v551 = vpop.f32.mrf.mxu0
    %552 = vmatprep.mubr.f32.mxu0 0.0
    %553 = vmatmul.mubr.f32.gmra.mxu0 %v335
    %v554 = vpop.f32.mrf.mxu0
    %v555 = vadd.f32 %v228, %v554
    %v556 = vpop.f32.mrf.mxu0
    %557 = vmatprep.mubr.f32.mxu0 0.0
    %558 = vmatmul.mubr.f32.gmra.mxu0 %v338
    %v559 = vpop.f32.mrf.mxu0
    %v560 = vadd.f32 %v233, %v559
    %v561 = vpop.f32.mrf.mxu0
    %562 = vmatprep.mubr.f32.mxu0 0.0
    %563 = vmatmul.mubr.f32.gmra.mxu0 %v341
    %v564 = vpop.f32.mrf.mxu0
    %v565 = vadd.f32 %v238, %v564
    %v566 = vpop.f32.mrf.mxu0
    %567 = vmatprep.mubr.f32.mxu0 0.0
    %568 = vmatmul.mubr.f32.gmra.mxu0 %v344
    %v569 = vpop.f32.mrf.mxu0
    %v570 = vadd.f32 %v243, %v569
    %v571 = vpop.f32.mrf.mxu0
    %572 = vmatprep.mubr.f32.mxu0 0.0
    %573 = vmatmul.mubr.f32.gmra.mxu0 %v347
    %v574 = vpop.f32.mrf.mxu0
    %v575 = vadd.f32 %v248, %v574
    %v576 = vpop.f32.mrf.mxu0
    %577 = vmatprep.mubr.f32.mxu0 0.0
    %578 = vmatmul.mubr.f32.gmra.mxu0 %v350
    %v579 = vpop.f32.mrf.mxu0
    %v580 = vadd.f32 %v253, %v579
    %v581 = vpop.f32.mrf.mxu0
    %582 = vdwg.mxu0
    %vm583 = vcmp.gt.f32.partialorder %v425, 0.0
    %vm584 = vcmp.gt.f32.partialorder %v430, 0.0
    %vm585 = vcmp.gt.f32.partialorder %v435, 0.0
    %vm586 = vcmp.gt.f32.partialorder %v440, 0.0
    %vm587 = vcmp.gt.f32.partialorder %v445, 0.0
    %vm588 = vcmp.gt.f32.partialorder %v450, 0.0
    %vm589 = vcmp.gt.f32.partialorder %v455, 0.0
    %vm590 = vcmp.gt.f32.partialorder %v460, 0.0
    %vm591 = vcmp.gt.f32.partialorder %v465, 0.0
    %vm592 = vcmp.gt.f32.partialorder %v470, 0.0
    %vm593 = vcmp.gt.f32.partialorder %v475, 0.0
    %vm594 = vcmp.gt.f32.partialorder %v480, 0.0
    %vm595 = vcmp.gt.f32.partialorder %v485, 0.0
    %vm596 = vcmp.gt.f32.partialorder %v490, 0.0
    %vm597 = vcmp.gt.f32.partialorder %v495, 0.0
    %vm598 = vcmp.gt.f32.partialorder %v500, 0.0
    %vm599 = vcmp.gt.f32.partialorder %v505, 0.0
    %vm600 = vcmp.gt.f32.partialorder %v510, 0.0
    %vm601 = vcmp.gt.f32.partialorder %v515, 0.0
    %vm602 = vcmp.gt.f32.partialorder %v520, 0.0
    %vm603 = vcmp.gt.f32.partialorder %v525, 0.0
    %vm604 = vcmp.gt.f32.partialorder %v530, 0.0
    %vm605 = vcmp.gt.f32.partialorder %v535, 0.0
    %vm606 = vcmp.gt.f32.partialorder %v540, 0.0
    %vm607 = vcmp.gt.f32.partialorder %v545, 0.0
    %vm608 = vcmp.gt.f32.partialorder %v550, 0.0
    %vm609 = vcmp.gt.f32.partialorder %v555, 0.0
    %vm610 = vcmp.gt.f32.partialorder %v560, 0.0
    %vm611 = vcmp.gt.f32.partialorder %v565, 0.0
    %vm612 = vcmp.gt.f32.partialorder %v570, 0.0
    %vm613 = vcmp.gt.f32.partialorder %v575, 0.0
    %vm614 = vcmp.gt.f32.partialorder %v580, 0.0
    %v615 = vmin.f32 %v425, 0.0
    %v616 = vmin.f32 %v430, 0.0
    %v617 = vmin.f32 %v435, 0.0
    %v618 = vmin.f32 %v440, 0.0
    %v619 = vmin.f32 %v445, 0.0
    %v620 = vmin.f32 %v450, 0.0
    %v621 = vmin.f32 %v455, 0.0
    %v622 = vmin.f32 %v460, 0.0
    %v623 = vmin.f32 %v465, 0.0
    %v624 = vmin.f32 %v470, 0.0
    %v625 = vmin.f32 %v475, 0.0
    %v626 = vmin.f32 %v480, 0.0
    %v627 = vmin.f32 %v485, 0.0
    %v628 = vmin.f32 %v490, 0.0
    %v629 = vmin.f32 %v495, 0.0
    %v630 = vmin.f32 %v500, 0.0
    %v631 = vmin.f32 %v505, 0.0
    %v632 = vmin.f32 %v510, 0.0
    %v633 = vmin.f32 %v515, 0.0
    %v634 = vmin.f32 %v520, 0.0
    %v635 = vmin.f32 %v525, 0.0
    %v636 = vmin.f32 %v530, 0.0
    %v637 = vmin.f32 %v535, 0.0
    %v638 = vmin.f32 %v540, 0.0
    %v639 = vmin.f32 %v545, 0.0
    %v640 = vmin.f32 %v550, 0.0
    %v641 = vmin.f32 %v555, 0.0
    %v642 = vmin.f32 %v560, 0.0
    %v643 = vmin.f32 %v565, 0.0
    %v644 = vmin.f32 %v570, 0.0
    %v645 = vmin.f32 %v575, 0.0
    %v646 = vmin.f32 %v580, 0.0
    %v647 = vmul.f32 %v615, 1.442695
    %v648 = vpow.pop %v647
    %v649 = vmul.f32 %v616, 1.442695
    %v650 = vpow.pop %v649
    %v651 = vmul.f32 %v617, 1.442695
    %v652 = vpow.pop %v651
    %v653 = vmul.f32 %v618, 1.442695
    %v654 = vpow.pop %v653
    %v655 = vmul.f32 %v619, 1.442695
    %v656 = vpow.pop %v655
    %v657 = vmul.f32 %v620, 1.442695
    %v658 = vpow.pop %v657
    %v659 = vmul.f32 %v621, 1.442695
    %v660 = vpow.pop %v659
    %v661 = vmul.f32 %v622, 1.442695
    %v662 = vpow.pop %v661
    %v663 = vmul.f32 %v623, 1.442695
    %v664 = vpow.pop %v663
    %v665 = vmul.f32 %v624, 1.442695
    %v666 = vpow.pop %v665
    %v667 = vmul.f32 %v625, 1.442695
    %v668 = vpow.pop %v667
    %v669 = vmul.f32 %v626, 1.442695
    %v670 = vpow.pop %v669
    %v671 = vmul.f32 %v627, 1.442695
    %v672 = vpow.pop %v671
    %v673 = vmul.f32 %v628, 1.442695
    %v674 = vpow.pop %v673
    %v675 = vmul.f32 %v629, 1.442695
    %v676 = vpow.pop %v675
    %v677 = vmul.f32 %v630, 1.442695
    %v678 = vpow.pop %v677
    %v679 = vmul.f32 %v631, 1.442695
    %v680 = vpow.pop %v679
    %v681 = vmul.f32 %v632, 1.442695
    %v682 = vpow.pop %v681
    %v683 = vmul.f32 %v633, 1.442695
    %v684 = vpow.pop %v683
    %v685 = vmul.f32 %v634, 1.442695
    %v686 = vpow.pop %v685
    %v687 = vmul.f32 %v635, 1.442695
    %v688 = vpow.pop %v687
    %v689 = vmul.f32 %v636, 1.442695
    %v690 = vpow.pop %v689
    %v691 = vmul.f32 %v637, 1.442695
    %v692 = vpow.pop %v691
    %v693 = vmul.f32 %v638, 1.442695
    %v694 = vpow.pop %v693
    %v695 = vmul.f32 %v639, 1.442695
    %v696 = vpow.pop %v695
    %v697 = vmul.f32 %v640, 1.442695
    %v698 = vpow.pop %v697
    %v699 = vmul.f32 %v641, 1.442695
    %v700 = vpow.pop %v699
    %v701 = vmul.f32 %v642, 1.442695
    %v702 = vpow.pop %v701
    %v703 = vmul.f32 %v643, 1.442695
    %v704 = vpow.pop %v703
    %v705 = vmul.f32 %v644, 1.442695
    %v706 = vpow.pop %v705
    %v707 = vmul.f32 %v645, 1.442695
    %v708 = vpow.pop %v707
    %v709 = vmul.f32 %v646, 1.442695
    %v710 = vpow.pop %v709
    %v711 = vmul.f32 %v648, 1.6732632
    %v712 = vmul.f32 %v650, 1.6732632
    %v713 = vmul.f32 %v652, 1.6732632
    %v714 = vmul.f32 %v654, 1.6732632
    %v715 = vmul.f32 %v656, 1.6732632
    %v716 = vmul.f32 %v658, 1.6732632
    %v717 = vmul.f32 %v660, 1.6732632
    %v718 = vmul.f32 %v662, 1.6732632
    %v719 = vmul.f32 %v664, 1.6732632
    %v720 = vmul.f32 %v666, 1.6732632
    %v721 = vmul.f32 %v668, 1.6732632
    %v722 = vmul.f32 %v670, 1.6732632
    %v723 = vmul.f32 %v672, 1.6732632
    %v724 = vmul.f32 %v674, 1.6732632
    %v725 = vmul.f32 %v676, 1.6732632
    %v726 = vmul.f32 %v678, 1.6732632
    %v727 = vmul.f32 %v680, 1.6732632
    %v728 = vmul.f32 %v682, 1.6732632
    %v729 = vmul.f32 %v684, 1.6732632
    %v730 = vmul.f32 %v686, 1.6732632
    %v731 = vmul.f32 %v688, 1.6732632
    %v732 = vmul.f32 %v690, 1.6732632
    %v733 = vmul.f32 %v692, 1.6732632
    %v734 = vmul.f32 %v694, 1.6732632
    %v735 = vmul.f32 %v696, 1.6732632
    %v736 = vmul.f32 %v698, 1.6732632
    %v737 = vmul.f32 %v700, 1.6732632
    %v738 = vmul.f32 %v702, 1.6732632
    %v739 = vmul.f32 %v704, 1.6732632
    %v740 = vmul.f32 %v706, 1.6732632
    %v741 = vmul.f32 %v708, 1.6732632
    %v742 = vmul.f32 %v710, 1.6732632
    %v743 = vsub.f32 %v711, 1.6732632
    %v744 = vsub.f32 %v712, 1.6732632
    %v745 = vsub.f32 %v713, 1.6732632
    %v746 = vsub.f32 %v714, 1.6732632
    %v747 = vsub.f32 %v715, 1.6732632
    %v748 = vsub.f32 %v716, 1.6732632
    %v749 = vsub.f32 %v717, 1.6732632
    %v750 = vsub.f32 %v718, 1.6732632
    %v751 = vsub.f32 %v719, 1.6732632
    %v752 = vsub.f32 %v720, 1.6732632
    %v753 = vsub.f32 %v721, 1.6732632
    %v754 = vsub.f32 %v722, 1.6732632
    %v755 = vsub.f32 %v723, 1.6732632
    %v756 = vsub.f32 %v724, 1.6732632
    %v757 = vsub.f32 %v725, 1.6732632
    %v758 = vsub.f32 %v726, 1.6732632
    %v759 = vsub.f32 %v727, 1.6732632
    %v760 = vsub.f32 %v728, 1.6732632
    %v761 = vsub.f32 %v729, 1.6732632
    %v762 = vsub.f32 %v730, 1.6732632
    %v763 = vsub.f32 %v731, 1.6732632
    %v764 = vsub.f32 %v732, 1.6732632
    %v765 = vsub.f32 %v733, 1.6732632
    %v766 = vsub.f32 %v734, 1.6732632
    %v767 = vsub.f32 %v735, 1.6732632
    %v768 = vsub.f32 %v736, 1.6732632
    %v769 = vsub.f32 %v737, 1.6732632
    %v770 = vsub.f32 %v738, 1.6732632
    %v771 = vsub.f32 %v739, 1.6732632
    %v772 = vsub.f32 %v740, 1.6732632
    %v773 = vsub.f32 %v741, 1.6732632
    %v774 = vsub.f32 %v742, 1.6732632
    %v775 = vsel %vm583, %v425, %v743
    %v776 = vsel %vm584, %v430, %v744
    %v777 = vsel %vm585, %v435, %v745
    %v778 = vsel %vm586, %v440, %v746
    %v779 = vsel %vm587, %v445, %v747
    %v780 = vsel %vm588, %v450, %v748
    %v781 = vsel %vm589, %v455, %v749
    %v782 = vsel %vm590, %v460, %v750
    %v783 = vsel %vm591, %v465, %v751
    %v784 = vsel %vm592, %v470, %v752
    %v785 = vsel %vm593, %v475, %v753
    %v786 = vsel %vm594, %v480, %v754
    %v787 = vsel %vm595, %v485, %v755
    %v788 = vsel %vm596, %v490, %v756
    %v789 = vsel %vm597, %v495, %v757
    %v790 = vsel %vm598, %v500, %v758
    %v791 = vsel %vm599, %v505, %v759
    %v792 = vsel %vm600, %v510, %v760
    %v793 = vsel %vm601, %v515, %v761
    %v794 = vsel %vm602, %v520, %v762
    %v795 = vsel %vm603, %v525, %v763
    %v796 = vsel %vm604, %v530, %v764
    %v797 = vsel %vm605, %v535, %v765
    %v798 = vsel %vm606, %v540, %v766
    %v799 = vsel %vm607, %v545, %v767
    %v800 = vsel %vm608, %v550, %v768
    %v801 = vsel %vm609, %v555, %v769
    %v802 = vsel %vm610, %v560, %v770
    %v803 = vsel %vm611, %v565, %v771
    %v804 = vsel %vm612, %v570, %v772
    %v805 = vsel %vm613, %v575, %v773
    %v806 = vsel %vm614, %v580, %v774
    %v807 = vld [vmem:[%s3] sm:$0xff]
    %v808 = vld [vmem:[%s3 + $0x8] sm:$0xff]
    %v809 = vld [vmem:[%s3 + $0x10] sm:$0xff]
    %v810 = vld [vmem:[%s3 + $0x18] sm:$0xff]
    %v811 = vld [vmem:[%s3 + $0x20] sm:$0xff]
    %v812 = vld [vmem:[%s3 + $0x28] sm:$0xff]
    %v813 = vld [vmem:[%s3 + $0x30] sm:$0xff]
    %v814 = vld [vmem:[%s3 + $0x38] sm:$0xff]
    %v815 = vld [vmem:[%s3 + $0x40] sm:$0xff]
    %v816 = vld [vmem:[%s3 + $0x48] sm:$0xff]
    %v817 = vld [vmem:[%s3 + $0x50] sm:$0xff]
    %v818 = vld [vmem:[%s3 + $0x58] sm:$0xff]
    %v819 = vld [vmem:[%s3 + $0x60] sm:$0xff]
    %v820 = vld [vmem:[%s3 + $0x68] sm:$0xff]
    %v821 = vld [vmem:[%s3 + $0x70] sm:$0xff]
    %v822 = vld [vmem:[%s3 + $0x78] sm:$0xff]
    %v823 = vld [vmem:[%s3 + $0x80] sm:$0xff]
    %v824 = vld [vmem:[%s3 + $0x88] sm:$0xff]
    %v825 = vld [vmem:[%s3 + $0x90] sm:$0xff]
    %v826 = vld [vmem:[%s3 + $0x98] sm:$0xff]
    %v827 = vld [vmem:[%s3 + $0xa0] sm:$0xff]
    %v828 = vld [vmem:[%s3 + $0xa8] sm:$0xff]
    %v829 = vld [vmem:[%s3 + $0xb0] sm:$0xff]
    %v830 = vld [vmem:[%s3 + $0xb8] sm:$0xff]
    %v831 = vld [vmem:[%s3 + $0xc0] sm:$0xff]
    %v832 = vld [vmem:[%s3 + $0xc8] sm:$0xff]
    %v833 = vld [vmem:[%s3 + $0xd0] sm:$0xff]
    %v834 = vld [vmem:[%s3 + $0xd8] sm:$0xff]
    %v835 = vld [vmem:[%s3 + $0xe0] sm:$0xff]
    %v836 = vld [vmem:[%s3 + $0xe8] sm:$0xff]
    %v837 = vld [vmem:[%s3 + $0xf0] sm:$0xff]
    %v838 = vld [vmem:[%s3 + $0xf8] sm:$0xff]
    %v839 = vld [vmem:[%s4] sm:$0xff]
    %v840 = vld [vmem:[%s4 + $0x8] sm:$0xff]
    %v841 = vld [vmem:[%s4 + $0x10] sm:$0xff]
    %v842 = vld [vmem:[%s4 + $0x18] sm:$0xff]
    %v843 = vld [vmem:[%s4 + $0x20] sm:$0xff]
    %v844 = vld [vmem:[%s4 + $0x28] sm:$0xff]
    %v845 = vld [vmem:[%s4 + $0x30] sm:$0xff]
    %v846 = vld [vmem:[%s4 + $0x38] sm:$0xff]
    %v847 = vld [vmem:[%s4 + $0x40] sm:$0xff]
    %v848 = vld [vmem:[%s4 + $0x48] sm:$0xff]
    %v849 = vld [vmem:[%s4 + $0x50] sm:$0xff]
    %v850 = vld [vmem:[%s4 + $0x58] sm:$0xff]
    %v851 = vld [vmem:[%s4 + $0x60] sm:$0xff]
    %v852 = vld [vmem:[%s4 + $0x68] sm:$0xff]
    %v853 = vld [vmem:[%s4 + $0x70] sm:$0xff]
    %v854 = vld [vmem:[%s4 + $0x78] sm:$0xff]
    %856 = vset.pattern.permute.xlu0 0
    %857 = vperm.xlu0 %856, %v839
    %v858 = vpop.permute.xlu0 %857
    %861 = vset.pattern.permute.xlu0 0
    %862 = vperm.xlu0 %861, %v840
    %v863 = vpop.permute.xlu0 %862
    %866 = vset.pattern.permute.xlu0 0
    %867 = vperm.xlu0 %866, %v841
    %v868 = vpop.permute.xlu0 %867
    %871 = vset.pattern.permute.xlu0 0
    %872 = vperm.xlu0 %871, %v842
    %v873 = vpop.permute.xlu0 %872
    %876 = vset.pattern.permute.xlu0 0
    %877 = vperm.xlu0 %876, %v843
    %v878 = vpop.permute.xlu0 %877
    %881 = vset.pattern.permute.xlu0 0
    %882 = vperm.xlu0 %881, %v844
    %v883 = vpop.permute.xlu0 %882
    %886 = vset.pattern.permute.xlu0 0
    %887 = vperm.xlu0 %886, %v845
    %v888 = vpop.permute.xlu0 %887
    %891 = vset.pattern.permute.xlu0 0
    %892 = vperm.xlu0 %891, %v846
    %v893 = vpop.permute.xlu0 %892
    %896 = vset.pattern.permute.xlu0 0
    %897 = vperm.xlu0 %896, %v847
    %v898 = vpop.permute.xlu0 %897
    %901 = vset.pattern.permute.xlu0 0
    %902 = vperm.xlu0 %901, %v848
    %v903 = vpop.permute.xlu0 %902
    %906 = vset.pattern.permute.xlu0 0
    %907 = vperm.xlu0 %906, %v849
    %v908 = vpop.permute.xlu0 %907
    %911 = vset.pattern.permute.xlu0 0
    %912 = vperm.xlu0 %911, %v850
    %v913 = vpop.permute.xlu0 %912
    %916 = vset.pattern.permute.xlu0 0
    %917 = vperm.xlu0 %916, %v851
    %v918 = vpop.permute.xlu0 %917
    %921 = vset.pattern.permute.xlu0 0
    %922 = vperm.xlu0 %921, %v852
    %v923 = vpop.permute.xlu0 %922
    %926 = vset.pattern.permute.xlu0 0
    %927 = vperm.xlu0 %926, %v853
    %v928 = vpop.permute.xlu0 %927
    %931 = vset.pattern.permute.xlu0 0
    %932 = vperm.xlu0 %931, %v854
    %v933 = vpop.permute.xlu0 %932
    %935 = vmatprep.subr.mxu0 0.0
    %936 = vmatpush1.msra.mxu0 %v790
    %937 = vmatprep.subr.mxu0 0.0
    %938 = vmatpush1.msra.mxu0 %v789
    %939 = vmatprep.subr.mxu0 0.0
    %940 = vmatpush1.msra.mxu0 %v788
    %941 = vmatprep.subr.mxu0 0.0
    %942 = vmatpush1.msra.mxu0 %v787
    %943 = vmatprep.subr.mxu0 0.0
    %944 = vmatpush1.msra.mxu0 %v786
    %945 = vmatprep.subr.mxu0 0.0
    %946 = vmatpush1.msra.mxu0 %v785
    %947 = vmatprep.subr.mxu0 0.0
    %948 = vmatpush1.msra.mxu0 %v784
    %949 = vmatprep.subr.mxu0 0.0
    %950 = vmatpush1.msra.mxu0 %v783
    %951 = vmatprep.subr.mxu0 0.0
    %952 = vmatpush1.msra.mxu0 %v782
    %953 = vmatprep.subr.mxu0 0.0
    %954 = vmatpush1.msra.mxu0 %v781
    %955 = vmatprep.subr.mxu0 0.0
    %956 = vmatpush1.msra.mxu0 %v780
    %957 = vmatprep.subr.mxu0 0.0
    %958 = vmatpush1.msra.mxu0 %v779
    %959 = vmatprep.subr.mxu0 0.0
    %960 = vmatpush1.msra.mxu0 %v778
    %961 = vmatprep.subr.mxu0 0.0
    %962 = vmatpush1.msra.mxu0 %v777
    %963 = vmatprep.subr.mxu0 0.0
    %964 = vmatpush1.msra.mxu0 %v776
    %965 = vmatprep.subr.mxu0 0.0
    %966 = vmatpush1.msra.mxu0 %v775
    %967 = vmatprep.subr.mxu0 0.0
    %968 = vmatpush2.msra.mxu0 %v806
    %969 = vmatprep.subr.mxu0 0.0
    %970 = vmatpush2.msra.mxu0 %v805
    %971 = vmatprep.subr.mxu0 0.0
    %972 = vmatpush2.msra.mxu0 %v804
    %973 = vmatprep.subr.mxu0 0.0
    %974 = vmatpush2.msra.mxu0 %v803
    %975 = vmatprep.subr.mxu0 0.0
    %976 = vmatpush2.msra.mxu0 %v802
    %977 = vmatprep.subr.mxu0 0.0
    %978 = vmatpush2.msra.mxu0 %v801
    %979 = vmatprep.subr.mxu0 0.0
    %980 = vmatpush2.msra.mxu0 %v800
    %981 = vmatprep.subr.mxu0 0.0
    %982 = vmatpush2.msra.mxu0 %v799
    %983 = vmatprep.subr.mxu0 0.0
    %984 = vmatpush2.msra.mxu0 %v798
    %985 = vmatprep.subr.mxu0 0.0
    %986 = vmatpush2.msra.mxu0 %v797
    %987 = vmatprep.subr.mxu0 0.0
    %988 = vmatpush2.msra.mxu0 %v796
    %989 = vmatprep.subr.mxu0 0.0
    %990 = vmatpush2.msra.mxu0 %v795
    %991 = vmatprep.subr.mxu0 0.0
    %992 = vmatpush2.msra.mxu0 %v794
    %993 = vmatprep.subr.mxu0 0.0
    %994 = vmatpush2.msra.mxu0 %v793
    %995 = vmatprep.subr.mxu0 0.0
    %996 = vmatpush2.msra.mxu0 %v792
    %997 = vmatprep.subr.mxu0 0.0
    %998 = vmatpush2.msra.mxu0 %v791
    %999 = vmatprep.mubr.f32.mxu0 %v808
    %1000 = vmatmul.mubr.f32.gmra.mxu0 %v807
    %v1001 = vpop.f32.mrf.mxu0
    %v1002 = vadd.f32 %v858, %v1001
    %v1003 = vpop.f32.mrf.mxu0
    %1004 = vmatprep.mubr.f32.mxu0 %v810
    %1005 = vmatmul.mubr.f32.gmra.mxu0 %v809
    %v1006 = vpop.f32.mrf.mxu0
    %v1007 = vadd.f32 %v863, %v1006
    %v1008 = vpop.f32.mrf.mxu0
    %1009 = vmatprep.mubr.f32.mxu0 %v812
    %1010 = vmatmul.mubr.f32.gmra.mxu0 %v811
    %v1011 = vpop.f32.mrf.mxu0
    %v1012 = vadd.f32 %v868, %v1011
    %v1013 = vpop.f32.mrf.mxu0
    %1014 = vmatprep.mubr.f32.mxu0 %v814
    %1015 = vmatmul.mubr.f32.gmra.mxu0 %v813
    %v1016 = vpop.f32.mrf.mxu0
    %v1017 = vadd.f32 %v873, %v1016
    %v1018 = vpop.f32.mrf.mxu0
    %1019 = vmatprep.mubr.f32.mxu0 %v816
    %1020 = vmatmul.mubr.f32.gmra.mxu0 %v815
    %v1021 = vpop.f32.mrf.mxu0
    %v1022 = vadd.f32 %v878, %v1021
    %v1023 = vpop.f32.mrf.mxu0
    %1024 = vmatprep.mubr.f32.mxu0 %v818
    %1025 = vmatmul.mubr.f32.gmra.mxu0 %v817
    %v1026 = vpop.f32.mrf.mxu0
    %v1027 = vadd.f32 %v883, %v1026
    %v1028 = vpop.f32.mrf.mxu0
    %1029 = vmatprep.mubr.f32.mxu0 %v820
    %1030 = vmatmul.mubr.f32.gmra.mxu0 %v819
    %v1031 = vpop.f32.mrf.mxu0
    %v1032 = vadd.f32 %v888, %v1031
    %v1033 = vpop.f32.mrf.mxu0
    %1034 = vmatprep.mubr.f32.mxu0 %v822
    %1035 = vmatmul.mubr.f32.gmra.mxu0 %v821
    %v1036 = vpop.f32.mrf.mxu0
    %v1037 = vadd.f32 %v893, %v1036
    %v1038 = vpop.f32.mrf.mxu0
    %1039 = vmatprep.mubr.f32.mxu0 %v824
    %1040 = vmatmul.mubr.f32.gmra.mxu0 %v823
    %v1041 = vpop.f32.mrf.mxu0
    %v1042 = vadd.f32 %v898, %v1041
    %v1043 = vpop.f32.mrf.mxu0
    %1044 = vmatprep.mubr.f32.mxu0 %v826
    %1045 = vmatmul.mubr.f32.gmra.mxu0 %v825
    %v1046 = vpop.f32.mrf.mxu0
    %v1047 = vadd.f32 %v903, %v1046
    %v1048 = vpop.f32.mrf.mxu0
    %1049 = vmatprep.mubr.f32.mxu0 %v828
    %1050 = vmatmul.mubr.f32.gmra.mxu0 %v827
    %v1051 = vpop.f32.mrf.mxu0
    %v1052 = vadd.f32 %v908, %v1051
    %v1053 = vpop.f32.mrf.mxu0
    %1054 = vmatprep.mubr.f32.mxu0 %v830
    %1055 = vmatmul.mubr.f32.gmra.mxu0 %v829
    %v1056 = vpop.f32.mrf.mxu0
    %v1057 = vadd.f32 %v913, %v1056
    %v1058 = vpop.f32.mrf.mxu0
    %1059 = vmatprep.mubr.f32.mxu0 %v832
    %1060 = vmatmul.mubr.f32.gmra.mxu0 %v831
    %v1061 = vpop.f32.mrf.mxu0
    %v1062 = vadd.f32 %v918, %v1061
    %v1063 = vpop.f32.mrf.mxu0
    %1064 = vmatprep.mubr.f32.mxu0 %v834
    %1065 = vmatmul.mubr.f32.gmra.mxu0 %v833
    %v1066 = vpop.f32.mrf.mxu0
    %v1067 = vadd.f32 %v923, %v1066
    %v1068 = vpop.f32.mrf.mxu0
    %1069 = vmatprep.mubr.f32.mxu0 %v836
    %1070 = vmatmul.mubr.f32.gmra.mxu0 %v835
    %v1071 = vpop.f32.mrf.mxu0
    %v1072 = vadd.f32 %v928, %v1071
    %v1073 = vpop.f32.mrf.mxu0
    %1074 = vmatprep.mubr.f32.mxu0 %v838
    %1075 = vmatmul.mubr.f32.gmra.mxu0 %v837
    %v1076 = vpop.f32.mrf.mxu0
    %v1077 = vadd.f32 %v933, %v1076
    %v1078 = vpop.f32.mrf.mxu0
    %1079 = vdwg.mxu0
    %vm1080 = vcmp.gt.f32.partialorder %v1002, 0.0
    %vm1081 = vcmp.gt.f32.partialorder %v1007, 0.0
    %vm1082 = vcmp.gt.f32.partialorder %v1012, 0.0
    %vm1083 = vcmp.gt.f32.partialorder %v1017, 0.0
    %vm1084 = vcmp.gt.f32.partialorder %v1022, 0.0
    %vm1085 = vcmp.gt.f32.partialorder %v1027, 0.0
    %vm1086 = vcmp.gt.f32.partialorder %v1032, 0.0
    %vm1087 = vcmp.gt.f32.partialorder %v1037, 0.0
    %vm1088 = vcmp.gt.f32.partialorder %v1042, 0.0
    %vm1089 = vcmp.gt.f32.partialorder %v1047, 0.0
    %vm1090 = vcmp.gt.f32.partialorder %v1052, 0.0
    %vm1091 = vcmp.gt.f32.partialorder %v1057, 0.0
    %vm1092 = vcmp.gt.f32.partialorder %v1062, 0.0
    %vm1093 = vcmp.gt.f32.partialorder %v1067, 0.0
    %vm1094 = vcmp.gt.f32.partialorder %v1072, 0.0
    %vm1095 = vcmp.gt.f32.partialorder %v1077, 0.0
    %v1096 = vmin.f32 %v1002, 0.0
    %v1097 = vmin.f32 %v1007, 0.0
    %v1098 = vmin.f32 %v1012, 0.0
    %v1099 = vmin.f32 %v1017, 0.0
    %v1100 = vmin.f32 %v1022, 0.0
    %v1101 = vmin.f32 %v1027, 0.0
    %v1102 = vmin.f32 %v1032, 0.0
    %v1103 = vmin.f32 %v1037, 0.0
    %v1104 = vmin.f32 %v1042, 0.0
    %v1105 = vmin.f32 %v1047, 0.0
    %v1106 = vmin.f32 %v1052, 0.0
    %v1107 = vmin.f32 %v1057, 0.0
    %v1108 = vmin.f32 %v1062, 0.0
    %v1109 = vmin.f32 %v1067, 0.0
    %v1110 = vmin.f32 %v1072, 0.0
    %v1111 = vmin.f32 %v1077, 0.0
    %v1112 = vmul.f32 %v1096, 1.442695
    %v1113 = vpow.pop %v1112
    %v1114 = vmul.f32 %v1097, 1.442695
    %v1115 = vpow.pop %v1114
    %v1116 = vmul.f32 %v1098, 1.442695
    %v1117 = vpow.pop %v1116
    %v1118 = vmul.f32 %v1099, 1.442695
    %v1119 = vpow.pop %v1118
    %v1120 = vmul.f32 %v1100, 1.442695
    %v1121 = vpow.pop %v1120
    %v1122 = vmul.f32 %v1101, 1.442695
    %v1123 = vpow.pop %v1122
    %v1124 = vmul.f32 %v1102, 1.442695
    %v1125 = vpow.pop %v1124
    %v1126 = vmul.f32 %v1103, 1.442695
    %v1127 = vpow.pop %v1126
    %v1128 = vmul.f32 %v1104, 1.442695
    %v1129 = vpow.pop %v1128
    %v1130 = vmul.f32 %v1105, 1.442695
    %v1131 = vpow.pop %v1130
    %v1132 = vmul.f32 %v1106, 1.442695
    %v1133 = vpow.pop %v1132
    %v1134 = vmul.f32 %v1107, 1.442695
    %v1135 = vpow.pop %v1134
    %v1136 = vmul.f32 %v1108, 1.442695
    %v1137 = vpow.pop %v1136
    %v1138 = vmul.f32 %v1109, 1.442695
    %v1139 = vpow.pop %v1138
    %v1140 = vmul.f32 %v1110, 1.442695
    %v1141 = vpow.pop %v1140
    %v1142 = vmul.f32 %v1111, 1.442695
    %v1143 = vpow.pop %v1142
    %v1144 = vmul.f32 %v1113, 1.6732632
    %v1145 = vmul.f32 %v1115, 1.6732632
    %v1146 = vmul.f32 %v1117, 1.6732632
    %v1147 = vmul.f32 %v1119, 1.6732632
    %v1148 = vmul.f32 %v1121, 1.6732632
    %v1149 = vmul.f32 %v1123, 1.6732632
    %v1150 = vmul.f32 %v1125, 1.6732632
    %v1151 = vmul.f32 %v1127, 1.6732632
    %v1152 = vmul.f32 %v1129, 1.6732632
    %v1153 = vmul.f32 %v1131, 1.6732632
    %v1154 = vmul.f32 %v1133, 1.6732632
    %v1155 = vmul.f32 %v1135, 1.6732632
    %v1156 = vmul.f32 %v1137, 1.6732632
    %v1157 = vmul.f32 %v1139, 1.6732632
    %v1158 = vmul.f32 %v1141, 1.6732632
    %v1159 = vmul.f32 %v1143, 1.6732632
    %v1160 = vsub.f32 %v1144, 1.6732632
    %v1161 = vsub.f32 %v1145, 1.6732632
    %v1162 = vsub.f32 %v1146, 1.6732632
    %v1163 = vsub.f32 %v1147, 1.6732632
    %v1164 = vsub.f32 %v1148, 1.6732632
    %v1165 = vsub.f32 %v1149, 1.6732632
    %v1166 = vsub.f32 %v1150, 1.6732632
    %v1167 = vsub.f32 %v1151, 1.6732632
    %v1168 = vsub.f32 %v1152, 1.6732632
    %v1169 = vsub.f32 %v1153, 1.6732632
    %v1170 = vsub.f32 %v1154, 1.6732632
    %v1171 = vsub.f32 %v1155, 1.6732632
    %v1172 = vsub.f32 %v1156, 1.6732632
    %v1173 = vsub.f32 %v1157, 1.6732632
    %v1174 = vsub.f32 %v1158, 1.6732632
    %v1175 = vsub.f32 %v1159, 1.6732632
    %v1176 = vsel %vm1080, %v1002, %v1160
    %v1177 = vsel %vm1081, %v1007, %v1161
    %v1178 = vsel %vm1082, %v1012, %v1162
    %v1179 = vsel %vm1083, %v1017, %v1163
    %v1180 = vsel %vm1084, %v1022, %v1164
    %v1181 = vsel %vm1085, %v1027, %v1165
    %v1182 = vsel %vm1086, %v1032, %v1166
    %v1183 = vsel %vm1087, %v1037, %v1167
    %v1184 = vsel %vm1088, %v1042, %v1168
    %v1185 = vsel %vm1089, %v1047, %v1169
    %v1186 = vsel %vm1090, %v1052, %v1170
    %v1187 = vsel %vm1091, %v1057, %v1171
    %v1188 = vsel %vm1092, %v1062, %v1172
    %v1189 = vsel %vm1093, %v1067, %v1173
    %v1190 = vsel %vm1094, %v1072, %v1174
    %v1191 = vsel %vm1095, %v1077, %v1175
    %v1192 = vld [vmem:[%s5] sm:$0x1]
    %v1193 = vld [vmem:[#allocation2] sm:$0x1]
    %1195 = vset.pattern.permute.xlu0 0
    %1196 = vperm.xlu0 %1195, %v1193
    %v1197 = vpop.permute.xlu0 %1196
    %v1199 = vlaneseq
    %v1200 = vshrl.u32 %v1199, 7
    %v1201 = vsub.s32 0, %v1200
    %v1202 = vrot.slane %v1197, %v1201
    %1203 = vmatprep.subr.mxu0 0.0
    %1204 = vmatpush1.msra.mxu0 %v1191
    %1205 = vmatprep.subr.mxu0 0.0
    %1206 = vmatpush1.msra.mxu0 %v1190
    %1207 = vmatprep.subr.mxu0 0.0
    %1208 = vmatpush1.msra.mxu0 %v1189
    %1209 = vmatprep.subr.mxu0 0.0
    %1210 = vmatpush1.msra.mxu0 %v1188
    %1211 = vmatprep.subr.mxu0 0.0
    %1212 = vmatpush1.msra.mxu0 %v1187
    %1213 = vmatprep.subr.mxu0 0.0
    %1214 = vmatpush1.msra.mxu0 %v1186
    %1215 = vmatprep.subr.mxu0 0.0
    %1216 = vmatpush1.msra.mxu0 %v1185
    %1217 = vmatprep.subr.mxu0 0.0
    %1218 = vmatpush1.msra.mxu0 %v1184
    %1219 = vmatprep.subr.mxu0 0.0
    %1220 = vmatpush1.msra.mxu0 %v1183
    %1221 = vmatprep.subr.mxu0 0.0
    %1222 = vmatpush1.msra.mxu0 %v1182
    %1223 = vmatprep.subr.mxu0 0.0
    %1224 = vmatpush1.msra.mxu0 %v1181
    %1225 = vmatprep.subr.mxu0 0.0
    %1226 = vmatpush1.msra.mxu0 %v1180
    %1227 = vmatprep.subr.mxu0 0.0
    %1228 = vmatpush1.msra.mxu0 %v1179
    %1229 = vmatprep.subr.mxu0 0.0
    %1230 = vmatpush1.msra.mxu0 %v1178
    %1231 = vmatprep.subr.mxu0 0.0
    %1232 = vmatpush1.msra.mxu0 %v1177
    %1233 = vmatprep.subr.mxu0 0.0
    %1234 = vmatpush1.msra.mxu0 %v1176
    %1235 = vmatprep.subr.mxu0 0.0
    %1236 = vmatpush2.msra.mxu0 0.0
    %1237 = vmatprep.subr.mxu0 0.0
    %1238 = vmatpush2.msra.mxu0 0.0
    %1239 = vmatprep.subr.mxu0 0.0
    %1240 = vmatpush2.msra.mxu0 0.0
    %1241 = vmatprep.subr.mxu0 0.0
    %1242 = vmatpush2.msra.mxu0 0.0
    %1243 = vmatprep.subr.mxu0 0.0
    %1244 = vmatpush2.msra.mxu0 0.0
    %1245 = vmatprep.subr.mxu0 0.0
    %1246 = vmatpush2.msra.mxu0 0.0
    %1247 = vmatprep.subr.mxu0 0.0
    %1248 = vmatpush2.msra.mxu0 0.0
    %1249 = vmatprep.subr.mxu0 0.0
    %1250 = vmatpush2.msra.mxu0 0.0
    %1251 = vmatprep.subr.mxu0 0.0
    %1252 = vmatpush2.msra.mxu0 0.0
    %1253 = vmatprep.subr.mxu0 0.0
    %1254 = vmatpush2.msra.mxu0 0.0
    %1255 = vmatprep.subr.mxu0 0.0
    %1256 = vmatpush2.msra.mxu0 0.0
    %1257 = vmatprep.subr.mxu0 0.0
    %1258 = vmatpush2.msra.mxu0 0.0
    %1259 = vmatprep.subr.mxu0 0.0
    %1260 = vmatpush2.msra.mxu0 0.0
    %1261 = vmatprep.subr.mxu0 0.0
    %1262 = vmatpush2.msra.mxu0 0.0
    %1263 = vmatprep.subr.mxu0 0.0
    %1264 = vmatpush2.msra.mxu0 0.0
    %1265 = vmatprep.subr.mxu0 0.0
    %1266 = vmatpush2.msra.mxu0 0.0
    %1267 = vmatprep.mubr.f32.mxu0 0.0
    %1268 = vmatmul.mubr.f32.gmra.mxu0 %v1192
    %v1269 = vpop.f32.mrf.mxu0
    %v1270 = vadd.f32 %v1202, %v1269
    %v1271 = vpop.f32.mrf.mxu0
    %1272 = vdwg.mxu0
    %vm1273 = vcmask 122880
    %1274 = vst.msk [vmem:[#allocation3] sm:$0x1] %vm1273, %v1270
    // Predicated region
    $region30: #{tpu_custom_call.1} parent=1 // pred_check
      _
    $region31: #{tpu_custom_call.1} parent=1 // pred_check_branch
      %1276 = sbr.rel (0) target = $region33
    $region32: #{tpu_custom_call.1} parent=1 // pred_region
      %s1278 = ssub.s32 16, 16
      %1279 = vsyncadd [#allocation4], %s1278
      %s1281 = sshll.u32 [#allocation3], 4
      %s1282 = int_to_ptr.vmem [resolvable:$true] %s1281
      %1284 = dma.vmem_to_hbm [thread:$0]  %s1282, 16, %s7, [#allocation4]
    $region33: #{tpu_custom_call.1} parent=1 // pred_fallthru
      _
    // Predicated region
    $region34: #{tpu_custom_call.1} parent=1 // pred_check
      _
    $region35: #{tpu_custom_call.1} parent=1 // pred_check_branch
      %1286 = sbr.rel (0) target = $region37
    $region36: #{tpu_custom_call.1} parent=1 // pred_region
      %1287 = dma.done [#allocation4], 16
    $region37: #{tpu_custom_call.1} parent=1 // pred_fallthru
      _
    %1288 = vsyncpa [#allocation4], 1

</llo_original>
